<compile_context>
chip_gen: v6e
topology: v6e:2x2x1
jax: 0.10.0
libtpu: 0.0.40
codegen_flags: <defaults>
</compile_context>

<pallas_src>
import jax
import jax.numpy as jnp
from jax.experimental import pallas as pl
from jax.experimental.pallas import tpu as pltpu


def _qnet_kernel(x_ref, w1_ref, b1_ref, w2_ref, b2_ref, o_ref):
    """y = relu(x @ W1 + b1) @ W2 + b2 for one batch tile."""
    x = x_ref[...]
    h = jnp.dot(x, w1_ref[...], preferred_element_type=jnp.float32)
    h = jnp.maximum(h + b1_ref[...], 0.0)          # bias broadcast + ReLU (VPU, f32)
    # astype is a no-op for f32 weights; if weights ever become bf16 this
    # intentionally downcasts the hidden activations for the second MXU pass
    # (accumulation stays f32 via preferred_element_type).
    y = jnp.dot(h.astype(w2_ref.dtype), w2_ref[...],
                preferred_element_type=jnp.float32)
    o_ref[...] = (y + b2_ref[...]).astype(o_ref.dtype)


def prepare_qnet_params(w1, b1, w2, b2):
    """One-time layout prep (call once at init, NOT per forward step):
      * PyTorch Linear stores W as (out, in); transpose to (in, out) once.
      * Biases become 2-D rows for TPU (sublane, lane) layout.
    No output lane-padding: at Q-net sizes the kernel is HBM/overhead-bound,
    so lane-dense stores don't pay for the 16x extra writeback they'd cost."""
    H, D = w1.shape
    A = w2.shape[0]
    w1_t = jnp.asarray(w1).T.astype(jnp.float32)                  # (D, H)
    b1_2d = jnp.asarray(b1).reshape(1, H).astype(jnp.float32)     # (1, H)
    w2_t = jnp.asarray(w2).T.astype(jnp.float32)                  # (H, A)
    b2_2d = jnp.asarray(b2).reshape(1, A).astype(jnp.float32)     # (1, A)
    return w1_t, b1_2d, w2_t, b2_2d


def q_net_forward(x, params, *, batch_tile=4096):
    """x: (B, gcn_encode_dim) f32.  params: from prepare_qnet_params.
       Returns (B, action_dim).  batch_tile must be a multiple of 8."""
    w1_t, b1_2d, w2_t, b2_2d = params
    B, D = x.shape
    H = w1_t.shape[1]
    A = w2_t.shape[1]

    if B <= batch_tile:
        # Latency path: no grid, no pipeline harness, no trailing slice.
        # Whole working set (a few KiB at Q-net sizes) lives in VMEM for one
        # invocation; output is written at its true (B, A) shape.
        return pl.pallas_call(
            _qnet_kernel,
            out_shape=jax.ShapeDtypeStruct((B, A), x.dtype),
            in_specs=[pl.BlockSpec(memory_space=pltpu.MemorySpace.VMEM)] * 5,
            out_specs=pl.BlockSpec(memory_space=pltpu.MemorySpace.VMEM),
        )(x, w1_t, b1_2d, w2_t, b2_2d)

    # Throughput path: tile the batch with a large tile (amortizes grid
    # bookkeeping).  Weights/biases index_maps return (0, 0) every step, so
    # they stay resident in VMEM.  No pad/slice: Pallas masks the partial
    # last block (rows independent -> garbage rows never reach valid output).
    TB = batch_tile
    nb = pl.cdiv(B, TB)
    itemsize = jnp.dtype(x.dtype).itemsize
    cost = pl.CostEstimate(
        flops=2 * B * (D * H + H * A),
        transcendentals=0,
        bytes_accessed=B * (D + A) * itemsize + (D * H + H + H * A + A) * 4,
    )
    return pl.pallas_call(
        _qnet_kernel,
        out_shape=jax.ShapeDtypeStruct((B, A), x.dtype),
        grid=(nb,),
        in_specs=[
            pl.BlockSpec((TB, D), lambda i: (i, 0)),   # batch tile of x
            pl.BlockSpec((D, H), lambda i: (0, 0)),    # resident W1
            pl.BlockSpec((1, H), lambda i: (0, 0)),    # resident b1
            pl.BlockSpec((H, A), lambda i: (0, 0)),    # resident W2
            pl.BlockSpec((1, A), lambda i: (0, 0)),    # resident b2
        ],
        out_specs=pl.BlockSpec((TB, A), lambda i: (i, 0)),
        compiler_params=pltpu.CompilerParams(
            # "parallel": rows independent; shards across v7x TensorCores.
            dimension_semantics=("parallel",)),
        cost_estimate=cost,
    )(x, w1_t, b1_2d, w2_t, b2_2d)


def _init_linear(key, out_dim, in_dim, dtype=jnp.float32):
    # Deterministic init mirroring nn.Linear's U(-1/sqrt(in), 1/sqrt(in)).
    kw, kb = jax.random.split(key)
    bound = 1.0 / jnp.sqrt(jnp.array(in_dim, dtype))
    w = jax.random.uniform(kw, (out_dim, in_dim), dtype, -bound, bound)
    b = jax.random.uniform(kb, (out_dim,), dtype, -bound, bound)
    return w, b


if __name__ == "__main__":
    gcn_encode_dim, hidden_dim, action_dim = 16, 32, 8

    key = jax.random.PRNGKey(0)
    kx1, kx2, k1, k2 = jax.random.split(key, 4)

    w1, b1 = _init_linear(k1, hidden_dim, gcn_encode_dim)
    w2, b2 = _init_linear(k2, action_dim, hidden_dim)
    params = prepare_qnet_params(w1, b1, w2, b2)   # one-time layout prep

    def ref(x):
        # Reference in plain JAX (same math as the PyTorch forward).
        return jnp.maximum(x @ w1.T + b1, 0.0) @ w2.T + b2

    # 1) Latency path (no grid), tiny batch, direct (B, A) output.
    x_small = jax.random.normal(kx1, (4, gcn_encode_dim), jnp.float32)
    y_small = q_net_forward(x_small, params)
    jax.block_until_ready(y_small)
    assert y_small.shape == (4, action_dim)
    assert jnp.allclose(y_small, ref(x_small), atol=1e-5, rtol=1e-5), \
        "latency-path mismatch vs reference"

    # 2) Batch-tiled path (grid over batch, resident weights, "parallel"),
    #    exercised with a small tile so the test stays cheap; B=36 with
    #    tile 8 exercises Pallas's partial-last-block masking (no pad/slice).
    x_big = jax.random.normal(kx2, (36, gcn_encode_dim), jnp.float32)
    y_big = q_net_forward(x_big, params, batch_tile=8)
    jax.block_until_ready(y_big)
    assert y_big.shape == (36, action_dim)
    assert jnp.allclose(y_big, ref(x_big), atol=1e-5, rtol=1e-5), \
        "tiled-path mismatch vs reference"

    print("KERNEL_OK")
</pallas_src>

<mosaic_0001>
module attributes {stable_mosaic.version = 11 : i64} {
  func.func @_qnet_kernel(%arg0: memref<4x16xf32, #tpu.memory_space<vmem>>, %arg1: memref<16x32xf32, #tpu.memory_space<vmem>>, %arg2: memref<1x32xf32, #tpu.memory_space<vmem>>, %arg3: memref<32x8xf32, #tpu.memory_space<vmem>>, %arg4: memref<1x8xf32, #tpu.memory_space<vmem>>, %arg5: memref<4x8xf32, #tpu.memory_space<vmem>>) attributes {dimension_semantics = [], scalar_prefetch = 0 : i64, scratch_operands = 0 : i64, tpu.core_type = #tpu.core_type<tc>} {
    %c0 = arith.constant 0 : index
    %c0_0 = arith.constant 0 : index
    %0 = vector.load %arg0[%c0, %c0_0] : memref<4x16xf32, #tpu.memory_space<vmem>>, vector<4x16xf32>
    %c0_1 = arith.constant 0 : index
    %c0_2 = arith.constant 0 : index
    %1 = vector.load %arg1[%c0_1, %c0_2] : memref<16x32xf32, #tpu.memory_space<vmem>>, vector<16x32xf32>
    %cst = arith.constant dense<0.000000e+00> : vector<4x32xf32>
    %2 = tpu.matmul %0, %1, %cst {dimension_numbers = #tpu.dot_dimension_numbers<[1], [0], [0], [1], [0, 0, 1, 1], [], []>} : vector<4x16xf32>, vector<16x32xf32>, vector<4x32xf32> -> vector<4x32xf32>
    %c0_3 = arith.constant 0 : index
    %c0_4 = arith.constant 0 : index
    %3 = vector.load %arg2[%c0_3, %c0_4] : memref<1x32xf32, #tpu.memory_space<vmem>>, vector<1x32xf32>
    %4 = vector.broadcast %3 : vector<1x32xf32> to vector<4x32xf32>
    %5 = arith.addf %2, %4 : vector<4x32xf32>
    %cst_5 = arith.constant 0.000000e+00 : f32
    %6 = vector.broadcast %cst_5 : f32 to vector<4x32xf32>
    %7 = arith.maximumf %5, %6 : vector<4x32xf32>
    %c0_6 = arith.constant 0 : index
    %c0_7 = arith.constant 0 : index
    %8 = vector.load %arg3[%c0_6, %c0_7] : memref<32x8xf32, #tpu.memory_space<vmem>>, vector<32x8xf32>
    %cst_8 = arith.constant dense<0.000000e+00> : vector<4x8xf32>
    %9 = tpu.matmul %7, %8, %cst_8 {dimension_numbers = #tpu.dot_dimension_numbers<[1], [0], [0], [1], [0, 0, 1, 1], [], []>} : vector<4x32xf32>, vector<32x8xf32>, vector<4x8xf32> -> vector<4x8xf32>
    %c0_9 = arith.constant 0 : index
    %c0_10 = arith.constant 0 : index
    %10 = vector.load %arg4[%c0_9, %c0_10] : memref<1x8xf32, #tpu.memory_space<vmem>>, vector<1x8xf32>
    %11 = vector.broadcast %10 : vector<1x8xf32> to vector<4x8xf32>
    %12 = arith.addf %9, %11 : vector<4x8xf32>
    %c0_11 = arith.constant 0 : index
    %c0_12 = arith.constant 0 : index
    %13 = vector.load %arg5[%c0_11, %c0_12] : memref<4x8xf32, #tpu.memory_space<vmem>>, vector<4x8xf32>
    tpu.vector_store %arg5[%c0_11, %c0_12], %12 {strides = array<i32>} : memref<4x8xf32, #tpu.memory_space<vmem>>, vector<4x8xf32>,
    return
  }
}

</mosaic_0001>

<llo_original>
// kernel: tpu_custom_call.1
$region0: #{tpu_custom_call.1}
  #allocation0 [shape = 'u32[]', space=smem, size = 0x4, offset = 0x4, fixed_abs, tag = 'smem constant byte address 0x4 - core index']
  #allocation1 [shape = 'u32[144,128]{1,0:T(1,128)}', space=vmem, size = 0x12000, scoped, tag = 'internal scratch']
  %s0 = inlined_call_operand.vmem [shape: f32[4,16], index: 0, kind: input, shape index: {}]
  %s1 = inlined_call_operand.vmem [shape: f32[16,32], index: 1, kind: input, shape index: {}]
  %s2 = inlined_call_operand.vmem [shape: f32[1,32], index: 2, kind: input, shape index: {}]
  %s3 = inlined_call_operand.vmem [shape: f32[32,8], index: 3, kind: input, shape index: {}]
  %s4 = inlined_call_operand.vmem [shape: f32[1,8], index: 4, kind: input, shape index: {}]
  %s5 = inlined_call_operand.hbm [shape: f32[4,8], index: 5, kind: output, shape index: {}]
  %s6 = sld [smem:[#allocation0]]
  $region30: #{tpu_custom_call.1} parent=0
    _
  %s8 = ssub.s32 1, %s6
  %s9 = scalar_select 0, %s8, %s6
  $region1: #{tpu_custom_call.1} parent=0
    #allocation2 [shape = 'u8[2048]{0}', space=vmem, size = 0x800, scoped, tag = 'output window, operand 0, single buffered']
    #allocation3 [shape = 's32[1]{0}', space=sflag, size = 0x4, scoped, tag = 'scoped memory for tpu_custom_call.1']
    %10 = vsyncpa [#allocation3], 0
    // Predicated region
    $region2: #{tpu_custom_call.1} parent=1 // pred_check
      _
    $region3: #{tpu_custom_call.1} parent=1 // pred_check_branch
      %12 = sbr.rel (0) target = $region5
    $region4: #{tpu_custom_call.1} parent=1 // pred_region
      _
    $region5: #{tpu_custom_call.1} parent=1 // pred_fallthru
      _
    // Predicated region
    $region6: #{tpu_custom_call.1} parent=1 // pred_check
      _
    $region7: #{tpu_custom_call.1} parent=1 // pred_check_branch
      %14 = sbr.rel (0) target = $region9
    $region8: #{tpu_custom_call.1} parent=1 // pred_region
      _
    $region9: #{tpu_custom_call.1} parent=1 // pred_fallthru
      _
    // Predicated region
    $region10: #{tpu_custom_call.1} parent=1 // pred_check
      _
    $region11: #{tpu_custom_call.1} parent=1 // pred_check_branch
      %16 = sbr.rel (0) target = $region13
    $region12: #{tpu_custom_call.1} parent=1 // pred_region
      _
    $region13: #{tpu_custom_call.1} parent=1 // pred_fallthru
      _
    // Predicated region
    $region14: #{tpu_custom_call.1} parent=1 // pred_check
      _
    $region15: #{tpu_custom_call.1} parent=1 // pred_check_branch
      %18 = sbr.rel (0) target = $region17
    $region16: #{tpu_custom_call.1} parent=1 // pred_region
      _
    $region17: #{tpu_custom_call.1} parent=1 // pred_fallthru
      _
    // Predicated region
    $region18: #{tpu_custom_call.1} parent=1 // pred_check
      _
    $region19: #{tpu_custom_call.1} parent=1 // pred_check_branch
      %20 = sbr.rel (0) target = $region21
    $region20: #{tpu_custom_call.1} parent=1 // pred_region
      _
    $region21: #{tpu_custom_call.1} parent=1 // pred_fallthru
      _
    %v21 = vld [vmem:[%s0] sm:$0xf]
    %v22 = vld [vmem:[%s1] sm:$0xff]
    %v23 = vld [vmem:[%s1 + $0x8] sm:$0xff]
    %v24 = vld [vmem:[%s2] sm:$0x1]
    %v26 = vlaneseq
    %v27 = vshrl.u32 %v26, 7
    %v28 = vsub.s32 0, %v27
    %v29 = vrot.slane %v24, %v28
    %vm31 = vcmask 130048
    %v33 = vsel %vm31, %v21, 0
    %35 = vmatprep.subr.mxu0 0.0
    %36 = vmatpush1.msra.mxu0 0.0
    %37 = vmatprep.subr.mxu0 0.0
    %38 = vmatpush1.msra.mxu0 0.0
    %39 = vmatprep.subr.mxu0 0.0
    %40 = vmatpush1.msra.mxu0 0.0
    %41 = vmatprep.subr.mxu0 0.0
    %42 = vmatpush1.msra.mxu0 0.0
    %43 = vmatprep.subr.mxu0 0.0
    %44 = vmatpush1.msra.mxu0 0.0
    %45 = vmatprep.subr.mxu0 0.0
    %46 = vmatpush1.msra.mxu0 0.0
    %47 = vmatprep.subr.mxu0 0.0
    %48 = vmatpush1.msra.mxu0 0.0
    %49 = vmatprep.subr.mxu0 0.0
    %50 = vmatpush1.msra.mxu0 0.0
    %51 = vmatprep.subr.mxu0 0.0
    %52 = vmatpush1.msra.mxu0 0.0
    %53 = vmatprep.subr.mxu0 0.0
    %54 = vmatpush1.msra.mxu0 0.0
    %55 = vmatprep.subr.mxu0 0.0
    %56 = vmatpush1.msra.mxu0 0.0
    %57 = vmatprep.subr.mxu0 0.0
    %58 = vmatpush1.msra.mxu0 0.0
    %59 = vmatprep.subr.mxu0 0.0
    %60 = vmatpush1.msra.mxu0 0.0
    %61 = vmatprep.subr.mxu0 0.0
    %62 = vmatpush1.msra.mxu0 0.0
    %63 = vmatprep.subr.mxu0 0.0
    %64 = vmatpush1.msra.mxu0 %v23
    %65 = vmatprep.subr.mxu0 0.0
    %66 = vmatpush1.msra.mxu0 %v22
    %67 = vmatprep.subr.mxu0 0.0
    %68 = vmatpush2.msra.mxu0 0.0
    %69 = vmatprep.subr.mxu0 0.0
    %70 = vmatpush2.msra.mxu0 0.0
    %71 = vmatprep.subr.mxu0 0.0
    %72 = vmatpush2.msra.mxu0 0.0
    %73 = vmatprep.subr.mxu0 0.0
    %74 = vmatpush2.msra.mxu0 0.0
    %75 = vmatprep.subr.mxu0 0.0
    %76 = vmatpush2.msra.mxu0 0.0
    %77 = vmatprep.subr.mxu0 0.0
    %78 = vmatpush2.msra.mxu0 0.0
    %79 = vmatprep.subr.mxu0 0.0
    %80 = vmatpush2.msra.mxu0 0.0
    %81 = vmatprep.subr.mxu0 0.0
    %82 = vmatpush2.msra.mxu0 0.0
    %83 = vmatprep.subr.mxu0 0.0
    %84 = vmatpush2.msra.mxu0 0.0
    %85 = vmatprep.subr.mxu0 0.0
    %86 = vmatpush2.msra.mxu0 0.0
    %87 = vmatprep.subr.mxu0 0.0
    %88 = vmatpush2.msra.mxu0 0.0
    %89 = vmatprep.subr.mxu0 0.0
    %90 = vmatpush2.msra.mxu0 0.0
    %91 = vmatprep.subr.mxu0 0.0
    %92 = vmatpush2.msra.mxu0 0.0
    %93 = vmatprep.subr.mxu0 0.0
    %94 = vmatpush2.msra.mxu0 0.0
    %95 = vmatprep.subr.mxu0 0.0
    %96 = vmatpush2.msra.mxu0 0.0
    %97 = vmatprep.subr.mxu0 0.0
    %98 = vmatpush2.msra.mxu0 0.0
    %99 = vmatprep.mubr.f32.mxu0 0.0
    %100 = vmatmul.mubr.f32.gmra.mxu0 %v33
    %v101 = vpop.f32.mrf.mxu0
    %v102 = vadd.f32 %v29, %v101
    %v103 = vpop.f32.mrf.mxu0
    %104 = vdwg.mxu0
    %v105 = vmax.f32 %v102, 0.0
    %v106 = vld [vmem:[%s3] sm:$0xff]
    %v107 = vld [vmem:[%s3 + $0x8] sm:$0xff]
    %v108 = vld [vmem:[%s3 + $0x10] sm:$0xff]
    %v109 = vld [vmem:[%s3 + $0x18] sm:$0xff]
    %v110 = vld [vmem:[%s4] sm:$0x1]
    %v112 = vlaneseq
    %v113 = vshrl.u32 %v112, 7
    %v114 = vsub.s32 0, %v113
    %v115 = vrot.slane %v110, %v114
    %vm117 = vcmask 261120
    %v119 = vsel %vm117, %v105, 0
    %121 = vmatprep.subr.mxu0 0.0
    %122 = vmatpush1.msra.mxu0 0.0
    %123 = vmatprep.subr.mxu0 0.0
    %124 = vmatpush1.msra.mxu0 0.0
    %125 = vmatprep.subr.mxu0 0.0
    %126 = vmatpush1.msra.mxu0 0.0
    %127 = vmatprep.subr.mxu0 0.0
    %128 = vmatpush1.msra.mxu0 0.0
    %129 = vmatprep.subr.mxu0 0.0
    %130 = vmatpush1.msra.mxu0 0.0
    %131 = vmatprep.subr.mxu0 0.0
    %132 = vmatpush1.msra.mxu0 0.0
    %133 = vmatprep.subr.mxu0 0.0
    %134 = vmatpush1.msra.mxu0 0.0
    %135 = vmatprep.subr.mxu0 0.0
    %136 = vmatpush1.msra.mxu0 0.0
    %137 = vmatprep.subr.mxu0 0.0
    %138 = vmatpush1.msra.mxu0 0.0
    %139 = vmatprep.subr.mxu0 0.0
    %140 = vmatpush1.msra.mxu0 0.0
    %141 = vmatprep.subr.mxu0 0.0
    %142 = vmatpush1.msra.mxu0 0.0
    %143 = vmatprep.subr.mxu0 0.0
    %144 = vmatpush1.msra.mxu0 0.0
    %145 = vmatprep.subr.mxu0 0.0
    %146 = vmatpush1.msra.mxu0 %v109
    %147 = vmatprep.subr.mxu0 0.0
    %148 = vmatpush1.msra.mxu0 %v108
    %149 = vmatprep.subr.mxu0 0.0
    %150 = vmatpush1.msra.mxu0 %v107
    %151 = vmatprep.subr.mxu0 0.0
    %152 = vmatpush1.msra.mxu0 %v106
    %153 = vmatprep.subr.mxu0 0.0
    %154 = vmatpush2.msra.mxu0 0.0
    %155 = vmatprep.subr.mxu0 0.0
    %156 = vmatpush2.msra.mxu0 0.0
    %157 = vmatprep.subr.mxu0 0.0
    %158 = vmatpush2.msra.mxu0 0.0
    %159 = vmatprep.subr.mxu0 0.0
    %160 = vmatpush2.msra.mxu0 0.0
    %161 = vmatprep.subr.mxu0 0.0
    %162 = vmatpush2.msra.mxu0 0.0
    %163 = vmatprep.subr.mxu0 0.0
    %164 = vmatpush2.msra.mxu0 0.0
    %165 = vmatprep.subr.mxu0 0.0
    %166 = vmatpush2.msra.mxu0 0.0
    %167 = vmatprep.subr.mxu0 0.0
    %168 = vmatpush2.msra.mxu0 0.0
    %169 = vmatprep.subr.mxu0 0.0
    %170 = vmatpush2.msra.mxu0 0.0
    %171 = vmatprep.subr.mxu0 0.0
    %172 = vmatpush2.msra.mxu0 0.0
    %173 = vmatprep.subr.mxu0 0.0
    %174 = vmatpush2.msra.mxu0 0.0
    %175 = vmatprep.subr.mxu0 0.0
    %176 = vmatpush2.msra.mxu0 0.0
    %177 = vmatprep.subr.mxu0 0.0
    %178 = vmatpush2.msra.mxu0 0.0
    %179 = vmatprep.subr.mxu0 0.0
    %180 = vmatpush2.msra.mxu0 0.0
    %181 = vmatprep.subr.mxu0 0.0
    %182 = vmatpush2.msra.mxu0 0.0
    %183 = vmatprep.subr.mxu0 0.0
    %184 = vmatpush2.msra.mxu0 0.0
    %185 = vmatprep.mubr.f32.mxu0 0.0
    %186 = vmatmul.mubr.f32.gmra.mxu0 %v119
    %v187 = vpop.f32.mrf.mxu0
    %v188 = vadd.f32 %v115, %v187
    %v189 = vpop.f32.mrf.mxu0
    %190 = vdwg.mxu0
    %vm191 = vcmask 60416
    %192 = vst.msk [vmem:[#allocation2] sm:$0xf] %vm191, %v188
    // Predicated region
    $region22: #{tpu_custom_call.1} parent=1 // pred_check
      _
    $region23: #{tpu_custom_call.1} parent=1 // pred_check_branch
      %194 = sbr.rel (0) target = $region25
    $region24: #{tpu_custom_call.1} parent=1 // pred_region
      %s196 = ssub.s32 64, 64
      %197 = vsyncadd [#allocation3], %s196
      %s199 = sshll.u32 [#allocation2], 4
      %s200 = int_to_ptr.vmem [resolvable:$true] %s199
      %202 = dma.vmem_to_hbm [thread:$0]  %s200, 64, %s5, [#allocation3]
    $region25: #{tpu_custom_call.1} parent=1 // pred_fallthru
      _
    // Predicated region
    $region26: #{tpu_custom_call.1} parent=1 // pred_check
      _
    $region27: #{tpu_custom_call.1} parent=1 // pred_check_branch
      %204 = sbr.rel (0) target = $region29
    $region28: #{tpu_custom_call.1} parent=1 // pred_region
      %205 = dma.done [#allocation3], 64
    $region29: #{tpu_custom_call.1} parent=1 // pred_fallthru
      _
    %206 = vsyncpa [#allocation3], 1

</llo_original>
